<compile_context>
chip_gen: v6e
topology: v6e:2x2x1
jax: 0.10.0
libtpu: 0.0.40
codegen_flags: <defaults>
</compile_context>

<pallas_src>
import numpy as np
import jax
import jax.numpy as jnp
from jax.experimental import pallas as pl
from jax.experimental.pallas import tpu as pltpu

# ---------------- small-shape config (mirrors IDLoss geometry, scaled 256 -> 16) ------
B = 2                       # batch
C = 3                       # RGB channels
H = W = 16                  # input spatial (module expects 256)
CROP_R0, CROP_R1 = 2, 14    # ~ rows 35:223
CROP_C0, CROP_C1 = 1, 13    # ~ cols 32:220
HC, WC = CROP_R1 - CROP_R0, CROP_C1 - CROP_C0   # 12 x 12 cropped region
HP = WP = 4                 # adaptive-pool target (~112); 12/4 = 3 -> exact 3x3 windows
SP = HP * WP                # 16 pooled spatial positions
F = 32                      # embedding dim (512 in IR-SE50)
KIN = C * H * W             # 768: NCHW-flattened image row (lane-dense)
PRELU_ALPHA = 0.25
EPS = 1e-12                 # torch F.normalize default eps
OUT_LANES = 128             # lane-dense output width -> unmasked lane stores
OUT_ROWS = 8                # one full (8,128) sublane tile: rows 0..B-1 diff, row B loss


# ---------------- fused kernel: embed([y; y_hat]) once + loss -------------------------
def id_loss_kernel(ws_ref, x_ref, w1_ref, out_ref):
    # ws_ref : (SP,)       f32 SMEM  -- spatial aggregation weights (replaces ws[p]*I w2)
    # x_ref  : (2B, KIN)   bf16      -- rows 0..B-1 = y, rows B..2B-1 = y_hat (NCHW-flat)
    # w1_ref : (KIN, SP*F) bf16      -- crop + adaptive-avg-pool + channel projection folded
    # out_ref: (8, 128)    f32       -- rows 0..B-1 diff_target, row B loss, rest zero
    h = jnp.dot(x_ref[...], w1_ref[...],
                preferred_element_type=jnp.float32)          # (2B, SP*F), f32 accumulate
    h = jnp.where(h >= 0, h, PRELU_ALPHA * h)                # PReLU, f32 on the VPU

    # Spatial aggregation: f[b, f'] = sum_p ws[p] * h[b, p*F + f']
    # (unrolled static lane slices of the lane-dense (2B, 512) tensor; no relayout)
    f = ws_ref[0] * h[:, 0:F]
    for p in range(1, SP):
        f = f + ws_ref[p] * h[:, p * F:(p + 1) * F]          # (2B, F)

    # F.normalize: x / max(||x||, eps) == x * rsqrt(max(||x||^2, eps^2))  (EUP rsqrt)
    ss = jnp.sum(f * f, axis=-1, keepdims=True)              # (2B, 1)
    f = f * jax.lax.rsqrt(jnp.maximum(ss, EPS * EPS))

    y_feat = f[:B]        # .detach() only affects backward; forward identical
    yh_feat = f[B:]
    per = jnp.mean((y_feat - yh_feat) ** 2, axis=-1, keepdims=True)   # (B, 1) diff_target
    loss = jnp.mean(per, axis=0, keepdims=True)                       # (1, 1)

    out_ref[0:B, :] = jnp.broadcast_to(per, (B, OUT_LANES))
    out_ref[B:B + 1, :] = jnp.broadcast_to(loss, (1, OUT_LANES))
    out_ref[B + 1:, :] = jnp.zeros((OUT_ROWS - B - 1, OUT_LANES), jnp.float32)


def id_loss_forward(y_hat, y, params):
    w1, ws = params
    # NCHW -> (B, C*H*W) collapses contiguous dims only (free reshape; crop/pool/projection
    # live inside w1).  y and y_hat stacked -> ONE matmul, one W1 weight push.
    x = jnp.concatenate([y.reshape(B, KIN), y_hat.reshape(B, KIN)],
                        axis=0).astype(jnp.bfloat16)          # (2B, KIN) bf16

    vmem = pl.BlockSpec(memory_space=pltpu.MemorySpace.VMEM)
    smem = pl.BlockSpec(memory_space=pltpu.MemorySpace.SMEM)

    flops = 2 * (2 * B) * KIN * (SP * F) + 4 * (2 * B) * SP * F
    bytes_accessed = (w1.size * 2) + (x.size * 2) + (ws.size * 4) + OUT_ROWS * OUT_LANES * 4

    out = pl.pallas_call(
        id_loss_kernel,
        out_shape=jax.ShapeDtypeStruct((OUT_ROWS, OUT_LANES), jnp.float32),
        in_specs=[smem, vmem, vmem],
        out_specs=vmem,
        cost_estimate=pl.CostEstimate(flops=flops, transcendentals=2 * B,
                                      bytes_accessed=bytes_accessed),
    )(ws, x, w1)
    return out[B, 0], out[0:B, 0]


# ---------------- deterministic parameter construction (host side, done once) ---------
def make_params():
    # Adaptive-avg-pool over the cropped window, expressed per (pooled position p,
    # channel c) as weights over the FULL HxW input -> the crop never materializes.
    M = np.zeros((SP, C, H, W), np.float32)
    kh, kw = HC // HP, WC // WP                      # exact 3x3 windows
    for ph in range(HP):
        for pw in range(WP):
            p = ph * WP + pw
            r0 = CROP_R0 + ph * kh
            c0 = CROP_C0 + pw * kw
            M[p, :, r0:r0 + kh, c0:c0 + kw] = 1.0 / (kh * kw)
    m_flat = jnp.asarray(M.reshape(SP, KIN))         # index k = c*H*W + r*W + col

    kw1, kw2 = jax.random.split(jax.random.PRNGKey(42))
    wc = jax.random.normal(kw1, (C, F), jnp.float32) * 0.1    # channel -> feature
    ws = jax.random.normal(kw2, (SP,), jnp.float32) * 0.1     # spatial aggregation

    # W1[k, p*F + f] = M[p, c(k), r, col] * wc[c(k), f]   (crop + pool + proj fold)
    wc_exp = jnp.repeat(wc, H * W, axis=0)                               # (KIN, F)
    w1 = (m_flat.T[:, :, None] * wc_exp[:, None, :]).reshape(KIN, SP * F)
    # bf16 is storage/DMA/MXU-input format only; all accumulation stays f32 in-kernel.
    return w1.astype(jnp.bfloat16), ws


if __name__ == "__main__":
    key = jax.random.PRNGKey(0)
    ky, kn = jax.random.split(key)
    y = jax.random.normal(ky, (B, C, H, W), jnp.float32)
    y_hat = y + 0.1 * jax.random.normal(kn, (B, C, H, W), jnp.float32)

    params = make_params()
    loss, diff_targets = id_loss_forward(y_hat, y, params)
    loss = jax.block_until_ready(loss)
    diff_targets = jax.block_until_ready(diff_targets)

    # id_logs like the PyTorch module
    id_logs = [{"diff_target": float(diff_targets[i])} for i in range(B)]
    assert bool(jnp.isfinite(loss)) and all(np.isfinite(d["diff_target"]) for d in id_logs)
    print("KERNEL_OK")
</pallas_src>

<mosaic_0001>
module attributes {stable_mosaic.version = 11 : i64} {
  func.func @id_loss_kernel(%arg0: memref<16xf32, #tpu.memory_space<smem>>, %arg1: memref<4x768xbf16, #tpu.memory_space<vmem>>, %arg2: memref<768x512xbf16, #tpu.memory_space<vmem>>, %arg3: memref<8x128xf32, #tpu.memory_space<vmem>>) attributes {dimension_semantics = [], scalar_prefetch = 0 : i64, scratch_operands = 0 : i64, tpu.core_type = #tpu.core_type<tc>} {
    %c0 = arith.constant 0 : index
    %c0_0 = arith.constant 0 : index
    %0 = vector.load %arg1[%c0, %c0_0] : memref<4x768xbf16, #tpu.memory_space<vmem>>, vector<4x768xbf16>
    %c0_1 = arith.constant 0 : index
    %c0_2 = arith.constant 0 : index
    %1 = vector.load %arg2[%c0_1, %c0_2] : memref<768x512xbf16, #tpu.memory_space<vmem>>, vector<768x512xbf16>
    %cst = arith.constant dense<0.000000e+00> : vector<4x512xf32>
    %2 = tpu.matmul %0, %1, %cst {dimension_numbers = #tpu.dot_dimension_numbers<[1], [0], [0], [1], [0, 0, 1, 1], [], []>} : vector<4x768xbf16>, vector<768x512xbf16>, vector<4x512xf32> -> vector<4x512xf32>
    %cst_3 = arith.constant 0.000000e+00 : f32
    %3 = vector.broadcast %cst_3 : f32 to vector<4x512xf32>
    %4 = arith.cmpf oge, %2, %3 : vector<4x512xf32>
    %cst_4 = arith.constant 2.500000e-01 : f32
    %5 = vector.broadcast %cst_4 : f32 to vector<4x512xf32>
    %6 = arith.mulf %5, %2 : vector<4x512xf32>
    %7 = arith.select %4, %2, %6 : vector<4x512xi1>, vector<4x512xf32>
    %c0_5 = arith.constant 0 : index
    %8 = memref.load %arg0[%c0_5] : memref<16xf32, #tpu.memory_space<smem>>
    %9 = vector.extract_strided_slice %7 {offsets = [0, 0], sizes = [4, 32], strides = [1, 1]} : vector<4x512xf32> to vector<4x32xf32>
    %10 = vector.broadcast %8 : f32 to vector<4x32xf32>
    %11 = arith.mulf %10, %9 : vector<4x32xf32>
    %c1 = arith.constant 1 : index
    %12 = memref.load %arg0[%c1] : memref<16xf32, #tpu.memory_space<smem>>
    %13 = vector.extract_strided_slice %7 {offsets = [0, 32], sizes = [4, 32], strides = [1, 1]} : vector<4x512xf32> to vector<4x32xf32>
    %14 = vector.broadcast %12 : f32 to vector<4x32xf32>
    %15 = arith.mulf %14, %13 : vector<4x32xf32>
    %16 = arith.addf %11, %15 : vector<4x32xf32>
    %c2 = arith.constant 2 : index
    %17 = memref.load %arg0[%c2] : memref<16xf32, #tpu.memory_space<smem>>
    %18 = vector.extract_strided_slice %7 {offsets = [0, 64], sizes = [4, 32], strides = [1, 1]} : vector<4x512xf32> to vector<4x32xf32>
    %19 = vector.broadcast %17 : f32 to vector<4x32xf32>
    %20 = arith.mulf %19, %18 : vector<4x32xf32>
    %21 = arith.addf %16, %20 : vector<4x32xf32>
    %c3 = arith.constant 3 : index
    %22 = memref.load %arg0[%c3] : memref<16xf32, #tpu.memory_space<smem>>
    %23 = vector.extract_strided_slice %7 {offsets = [0, 96], sizes = [4, 32], strides = [1, 1]} : vector<4x512xf32> to vector<4x32xf32>
    %24 = vector.broadcast %22 : f32 to vector<4x32xf32>
    %25 = arith.mulf %24, %23 : vector<4x32xf32>
    %26 = arith.addf %21, %25 : vector<4x32xf32>
    %c4 = arith.constant 4 : index
    %27 = memref.load %arg0[%c4] : memref<16xf32, #tpu.memory_space<smem>>
    %28 = vector.extract_strided_slice %7 {offsets = [0, 128], sizes = [4, 32], strides = [1, 1]} : vector<4x512xf32> to vector<4x32xf32>
    %29 = vector.broadcast %27 : f32 to vector<4x32xf32>
    %30 = arith.mulf %29, %28 : vector<4x32xf32>
    %31 = arith.addf %26, %30 : vector<4x32xf32>
    %c5 = arith.constant 5 : index
    %32 = memref.load %arg0[%c5] : memref<16xf32, #tpu.memory_space<smem>>
    %33 = vector.extract_strided_slice %7 {offsets = [0, 160], sizes = [4, 32], strides = [1, 1]} : vector<4x512xf32> to vector<4x32xf32>
    %34 = vector.broadcast %32 : f32 to vector<4x32xf32>
    %35 = arith.mulf %34, %33 : vector<4x32xf32>
    %36 = arith.addf %31, %35 : vector<4x32xf32>
    %c6 = arith.constant 6 : index
    %37 = memref.load %arg0[%c6] : memref<16xf32, #tpu.memory_space<smem>>
    %38 = vector.extract_strided_slice %7 {offsets = [0, 192], sizes = [4, 32], strides = [1, 1]} : vector<4x512xf32> to vector<4x32xf32>
    %39 = vector.broadcast %37 : f32 to vector<4x32xf32>
    %40 = arith.mulf %39, %38 : vector<4x32xf32>
    %41 = arith.addf %36, %40 : vector<4x32xf32>
    %c7 = arith.constant 7 : index
    %42 = memref.load %arg0[%c7] : memref<16xf32, #tpu.memory_space<smem>>
    %43 = vector.extract_strided_slice %7 {offsets = [0, 224], sizes = [4, 32], strides = [1, 1]} : vector<4x512xf32> to vector<4x32xf32>
    %44 = vector.broadcast %42 : f32 to vector<4x32xf32>
    %45 = arith.mulf %44, %43 : vector<4x32xf32>
    %46 = arith.addf %41, %45 : vector<4x32xf32>
    %c8 = arith.constant 8 : index
    %47 = memref.load %arg0[%c8] : memref<16xf32, #tpu.memory_space<smem>>
    %48 = vector.extract_strided_slice %7 {offsets = [0, 256], sizes = [4, 32], strides = [1, 1]} : vector<4x512xf32> to vector<4x32xf32>
    %49 = vector.broadcast %47 : f32 to vector<4x32xf32>
    %50 = arith.mulf %49, %48 : vector<4x32xf32>
    %51 = arith.addf %46, %50 : vector<4x32xf32>
    %c9 = arith.constant 9 : index
    %52 = memref.load %arg0[%c9] : memref<16xf32, #tpu.memory_space<smem>>
    %53 = vector.extract_strided_slice %7 {offsets = [0, 288], sizes = [4, 32], strides = [1, 1]} : vector<4x512xf32> to vector<4x32xf32>
    %54 = vector.broadcast %52 : f32 to vector<4x32xf32>
    %55 = arith.mulf %54, %53 : vector<4x32xf32>
    %56 = arith.addf %51, %55 : vector<4x32xf32>
    %c10 = arith.constant 10 : index
    %57 = memref.load %arg0[%c10] : memref<16xf32, #tpu.memory_space<smem>>
    %58 = vector.extract_strided_slice %7 {offsets = [0, 320], sizes = [4, 32], strides = [1, 1]} : vector<4x512xf32> to vector<4x32xf32>
    %59 = vector.broadcast %57 : f32 to vector<4x32xf32>
    %60 = arith.mulf %59, %58 : vector<4x32xf32>
    %61 = arith.addf %56, %60 : vector<4x32xf32>
    %c11 = arith.constant 11 : index
    %62 = memref.load %arg0[%c11] : memref<16xf32, #tpu.memory_space<smem>>
    %63 = vector.extract_strided_slice %7 {offsets = [0, 352], sizes = [4, 32], strides = [1, 1]} : vector<4x512xf32> to vector<4x32xf32>
    %64 = vector.broadcast %62 : f32 to vector<4x32xf32>
    %65 = arith.mulf %64, %63 : vector<4x32xf32>
    %66 = arith.addf %61, %65 : vector<4x32xf32>
    %c12 = arith.constant 12 : index
    %67 = memref.load %arg0[%c12] : memref<16xf32, #tpu.memory_space<smem>>
    %68 = vector.extract_strided_slice %7 {offsets = [0, 384], sizes = [4, 32], strides = [1, 1]} : vector<4x512xf32> to vector<4x32xf32>
    %69 = vector.broadcast %67 : f32 to vector<4x32xf32>
    %70 = arith.mulf %69, %68 : vector<4x32xf32>
    %71 = arith.addf %66, %70 : vector<4x32xf32>
    %c13 = arith.constant 13 : index
    %72 = memref.load %arg0[%c13] : memref<16xf32, #tpu.memory_space<smem>>
    %73 = vector.extract_strided_slice %7 {offsets = [0, 416], sizes = [4, 32], strides = [1, 1]} : vector<4x512xf32> to vector<4x32xf32>
    %74 = vector.broadcast %72 : f32 to vector<4x32xf32>
    %75 = arith.mulf %74, %73 : vector<4x32xf32>
    %76 = arith.addf %71, %75 : vector<4x32xf32>
    %c14 = arith.constant 14 : index
    %77 = memref.load %arg0[%c14] : memref<16xf32, #tpu.memory_space<smem>>
    %78 = vector.extract_strided_slice %7 {offsets = [0, 448], sizes = [4, 32], strides = [1, 1]} : vector<4x512xf32> to vector<4x32xf32>
    %79 = vector.broadcast %77 : f32 to vector<4x32xf32>
    %80 = arith.mulf %79, %78 : vector<4x32xf32>
    %81 = arith.addf %76, %80 : vector<4x32xf32>
    %c15 = arith.constant 15 : index
    %82 = memref.load %arg0[%c15] : memref<16xf32, #tpu.memory_space<smem>>
    %83 = vector.extract_strided_slice %7 {offsets = [0, 480], sizes = [4, 32], strides = [1, 1]} : vector<4x512xf32> to vector<4x32xf32>
    %84 = vector.broadcast %82 : f32 to vector<4x32xf32>
    %85 = arith.mulf %84, %83 : vector<4x32xf32>
    %86 = arith.addf %81, %85 : vector<4x32xf32>
    %87 = arith.mulf %86, %86 : vector<4x32xf32>
    %cst_6 = arith.constant dense<0.000000e+00> : vector<4xf32>
    %88 = vector.multi_reduction <add>, %87, %cst_6 [1] : vector<4x32xf32> to vector<4xf32>
    %89 = vector.shape_cast %88 : vector<4xf32> to vector<4x1xf32>
    %cst_7 = arith.constant 1.000000e-24 : f32
    %90 = vector.broadcast %cst_7 : f32 to vector<4x1xf32>
    %91 = arith.maximumf %89, %90 : vector<4x1xf32>
    %92 = math.rsqrt %91 : vector<4x1xf32>
    %93 = vector.broadcast %92 : vector<4x1xf32> to vector<4x32xf32>
    %94 = arith.mulf %86, %93 : vector<4x32xf32>
    %95 = vector.extract_strided_slice %94 {offsets = [0, 0], sizes = [2, 32], strides = [1, 1]} : vector<4x32xf32> to vector<2x32xf32>
    %96 = vector.extract_strided_slice %94 {offsets = [2, 0], sizes = [2, 32], strides = [1, 1]} : vector<4x32xf32> to vector<2x32xf32>
    %97 = arith.subf %95, %96 : vector<2x32xf32>
    %98 = arith.mulf %97, %97 : vector<2x32xf32>
    %cst_8 = arith.constant dense<0.000000e+00> : vector<2xf32>
    %99 = vector.multi_reduction <add>, %98, %cst_8 [1] : vector<2x32xf32> to vector<2xf32>
    %100 = vector.shape_cast %99 : vector<2xf32> to vector<2x1xf32>
    %cst_9 = arith.constant 3.200000e+01 : f32
    %101 = vector.broadcast %cst_9 : f32 to vector<2x1xf32>
    %102 = arith.divf %100, %101 : vector<2x1xf32>
    %cst_10 = arith.constant dense<0.000000e+00> : vector<1xf32>
    %103 = vector.multi_reduction <add>, %102, %cst_10 [0] : vector<2x1xf32> to vector<1xf32>
    %104 = vector.shape_cast %103 : vector<1xf32> to vector<1x1xf32>
    %cst_11 = arith.constant 2.000000e+00 : f32
    %105 = vector.broadcast %cst_11 : f32 to vector<1x1xf32>
    %106 = arith.divf %104, %105 : vector<1x1xf32>
    %107 = vector.shape_cast %102 : vector<2x1xf32> to vector<2x1xf32>
    %108 = vector.broadcast %107 : vector<2x1xf32> to vector<2x128xf32>
    %c0_12 = arith.constant 0 : index
    %c0_13 = arith.constant 0 : index
    %109 = vector.load %arg3[%c0_12, %c0_13] : memref<8x128xf32, #tpu.memory_space<vmem>>, vector<2x128xf32>
    tpu.vector_store %arg3[%c0_12, %c0_13], %108 {strides = array<i32>} : memref<8x128xf32, #tpu.memory_space<vmem>>, vector<2x128xf32>,
    %110 = vector.shape_cast %106 : vector<1x1xf32> to vector<1x1xf32>
    %111 = vector.broadcast %110 : vector<1x1xf32> to vector<1x128xf32>
    %c2_14 = arith.constant 2 : index
    %c0_15 = arith.constant 0 : index
    %112 = vector.load %arg3[%c2_14, %c0_15] : memref<8x128xf32, #tpu.memory_space<vmem>>, vector<1x128xf32>
    tpu.vector_store %arg3[%c2_14, %c0_15], %111 {strides = array<i32>} : memref<8x128xf32, #tpu.memory_space<vmem>>, vector<1x128xf32>,
    %cst_16 = arith.constant 0.000000e+00 : f32
    %113 = vector.broadcast %cst_16 : f32 to vector<5x128xf32>
    %c3_17 = arith.constant 3 : index
    %c0_18 = arith.constant 0 : index
    %114 = vector.load %arg3[%c3_17, %c0_18] : memref<8x128xf32, #tpu.memory_space<vmem>>, vector<5x128xf32>
    tpu.vector_store %arg3[%c3_17, %c0_18], %113 {strides = array<i32>} : memref<8x128xf32, #tpu.memory_space<vmem>>, vector<5x128xf32>,
    return
  }
}

</mosaic_0001>

<llo_original>
// kernel: tpu_custom_call.1
$region0: #{tpu_custom_call.1}
  #allocation0 [shape = 'u32[]', space=smem, size = 0x4, offset = 0x4, fixed_abs, tag = 'smem constant byte address 0x4 - core index']
  #allocation1 [shape = 'u32[144,128]{1,0:T(1,128)}', space=vmem, size = 0x12000, scoped, tag = 'internal scratch']
  %s0 = inlined_call_operand.hbm [shape: f32[16], index: 0, kind: input, shape index: {}]
  %s1 = inlined_call_operand.hbm [shape: bf16[4,768], index: 1, kind: input, shape index: {}]
  %s2 = inlined_call_operand.hbm [shape: bf16[768,512], index: 2, kind: input, shape index: {}]
  %s3 = inlined_call_operand.hbm [shape: f32[8,128], index: 3, kind: output, shape index: {}]
  %s4 = sld [smem:[#allocation0]]
  $region34: #{tpu_custom_call.1} parent=0
    _
  %s6 = ssub.s32 1, %s4
  %s7 = scalar_select 0, %s6, %s4
  $region1: #{tpu_custom_call.1} parent=0
    #allocation2 [shape = 'u8[512]{0}', space=smem, size = 0x200, scoped, tag = 'input window, operand 0, single buffered']
    #allocation3 [shape = 's32[1]{0}', space=sflag, size = 0x4, scoped, tag = 'scoped memory for tpu_custom_call.1']
    #allocation4 [shape = 's32[1]{0}', space=sflag, size = 0x4, scoped, tag = 'scoped memory for tpu_custom_call.1']
    #allocation5 [shape = 's32[1]{0}', space=sflag, size = 0x4, scoped, tag = 'scoped memory for tpu_custom_call.1']
    #allocation6 [shape = 'u8[6144]{0}', space=vmem, size = 0x1800, scoped, tag = 'input window, operand 1, single buffered']
    #allocation7 [shape = 'u8[786432]{0}', space=vmem, size = 0xc0000, scoped, tag = 'input window, operand 2, single buffered']
    #allocation8 [shape = 's32[1]{0}', space=sflag, size = 0x4, scoped, tag = 'scoped memory for tpu_custom_call.1']
    #allocation9 [shape = 'u8[4096]{0}', space=vmem, size = 0x1000, scoped, tag = 'output window, operand 0, single buffered']
    %8 = vsyncpa [#allocation5], 0
    %9 = vsyncpa [#allocation3], 0
    %10 = vsyncpa [#allocation8], 0
    %11 = vsyncpa [#allocation4], 0
    // Predicated region
    $region2: #{tpu_custom_call.1} parent=1 // pred_check
      _
    $region3: #{tpu_custom_call.1} parent=1 // pred_check_branch
      %13 = sbr.rel (0) target = $region5
    $region4: #{tpu_custom_call.1} parent=1 // pred_region
      %s15 = ssub.s32 16, 16
      %16 = vsyncadd [#allocation5], %s15
      %19 = dma.hbm_to_smem %s0, 16, [#allocation2], [#allocation5]
    $region5: #{tpu_custom_call.1} parent=1 // pred_fallthru
      _
    // Predicated region
    $region6: #{tpu_custom_call.1} parent=1 // pred_check
      _
    $region7: #{tpu_custom_call.1} parent=1 // pred_check_branch
      %21 = sbr.rel (0) target = $region9
    $region8: #{tpu_custom_call.1} parent=1 // pred_region
      %s23 = ssub.s32 192, 192
      %24 = vsyncadd [#allocation3], %s23
      %s26 = sshll.u32 [#allocation6], 4
      %s27 = int_to_ptr.vmem [resolvable:$true] %s26
      %29 = dma.hbm_to_vmem [thread:$0]  %s1, 192, %s27, [#allocation3]
    $region9: #{tpu_custom_call.1} parent=1 // pred_fallthru
      _
    // Predicated region
    $region10: #{tpu_custom_call.1} parent=1 // pred_check
      _
    $region11: #{tpu_custom_call.1} parent=1 // pred_check_branch
      %31 = sbr.rel (0) target = $region13
    $region12: #{tpu_custom_call.1} parent=1 // pred_region
      %s33 = ssub.s32 24576, 24576
      %34 = vsyncadd [#allocation8], %s33
      %s35 = sshll.u32 [#allocation7], 4
      %s36 = int_to_ptr.vmem [resolvable:$true] %s35
      %41 = dma.hbm_to_vmem [thread:$0]  %s2, 24576, %s36, [#allocation8], 256, 256, 16
    $region13: #{tpu_custom_call.1} parent=1 // pred_fallthru
      _
    // Predicated region
    $region14: #{tpu_custom_call.1} parent=1 // pred_check
      _
    $region15: #{tpu_custom_call.1} parent=1 // pred_check_branch
      %43 = sbr.rel (0) target = $region17
    $region16: #{tpu_custom_call.1} parent=1 // pred_region
      %44 = dma.done [#allocation5], 16
    $region17: #{tpu_custom_call.1} parent=1 // pred_fallthru
      _
    // Predicated region
    $region18: #{tpu_custom_call.1} parent=1 // pred_check
      _
    $region19: #{tpu_custom_call.1} parent=1 // pred_check_branch
      %46 = sbr.rel (0) target = $region21
    $region20: #{tpu_custom_call.1} parent=1 // pred_region
      %47 = dma.done [#allocation3], 192
    $region21: #{tpu_custom_call.1} parent=1 // pred_fallthru
      _
    // Predicated region
    $region22: #{tpu_custom_call.1} parent=1 // pred_check
      _
    $region23: #{tpu_custom_call.1} parent=1 // pred_check_branch
      %49 = sbr.rel (0) target = $region25
    $region24: #{tpu_custom_call.1} parent=1 // pred_region
      %50 = dma.done [#allocation8], 24576
    $region25: #{tpu_custom_call.1} parent=1 // pred_fallthru
      _
    %51 = sfence
    %v52 = vld [vmem:[#allocation6] sm:$0xff]
    %v53 = vld [vmem:[#allocation6 + $0x8] sm:$0xf]
    %v54 = vld [vmem:[#allocation7] sm:$0xff]
    %v55 = vld [vmem:[#allocation7 + $0x8] sm:$0xff]
    %v56 = vld [vmem:[#allocation7 + $0x10] sm:$0xff]
    %v57 = vld [vmem:[#allocation7 + $0x18] sm:$0xff]
    %v58 = vld [vmem:[#allocation7 + $0x20] sm:$0xff]
    %v59 = vld [vmem:[#allocation7 + $0x28] sm:$0xff]
    %v60 = vld [vmem:[#allocation7 + $0x30] sm:$0xff]
    %v61 = vld [vmem:[#allocation7 + $0x38] sm:$0xff]
    %v62 = vld [vmem:[#allocation7 + $0x40] sm:$0xff]
    %v63 = vld [vmem:[#allocation7 + $0x48] sm:$0xff]
    %v64 = vld [vmem:[#allocation7 + $0x50] sm:$0xff]
    %v65 = vld [vmem:[#allocation7 + $0x58] sm:$0xff]
    %v66 = vld [vmem:[#allocation7 + $0x60] sm:$0xff]
    %v67 = vld [vmem:[#allocation7 + $0x68] sm:$0xff]
    %v68 = vld [vmem:[#allocation7 + $0x70] sm:$0xff]
    %v69 = vld [vmem:[#allocation7 + $0x78] sm:$0xff]
    %v70 = vld [vmem:[#allocation7 + $0x80] sm:$0xff]
    %v71 = vld [vmem:[#allocation7 + $0x88] sm:$0xff]
    %v72 = vld [vmem:[#allocation7 + $0x90] sm:$0xff]
    %v73 = vld [vmem:[#allocation7 + $0x98] sm:$0xff]
    %v74 = vld [vmem:[#allocation7 + $0xa0] sm:$0xff]
    %v75 = vld [vmem:[#allocation7 + $0xa8] sm:$0xff]
    %v76 = vld [vmem:[#allocation7 + $0xb0] sm:$0xff]
    %v77 = vld [vmem:[#allocation7 + $0xb8] sm:$0xff]
    %v78 = vld [vmem:[#allocation7 + $0xc0] sm:$0xff]
    %v79 = vld [vmem:[#allocation7 + $0xc8] sm:$0xff]
    %v80 = vld [vmem:[#allocation7 + $0xd0] sm:$0xff]
    %v81 = vld [vmem:[#allocation7 + $0xd8] sm:$0xff]
    %v82 = vld [vmem:[#allocation7 + $0xe0] sm:$0xff]
    %v83 = vld [vmem:[#allocation7 + $0xe8] sm:$0xff]
    %v84 = vld [vmem:[#allocation7 + $0xf0] sm:$0xff]
    %v85 = vld [vmem:[#allocation7 + $0xf8] sm:$0xff]
    %v86 = vld [vmem:[#allocation7 + $0x100] sm:$0xff]
    %v87 = vld [vmem:[#allocation7 + $0x108] sm:$0xff]
    %v88 = vld [vmem:[#allocation7 + $0x110] sm:$0xff]
    %v89 = vld [vmem:[#allocation7 + $0x118] sm:$0xff]
    %v90 = vld [vmem:[#allocation7 + $0x120] sm:$0xff]
    %v91 = vld [vmem:[#allocation7 + $0x128] sm:$0xff]
    %v92 = vld [vmem:[#allocation7 + $0x130] sm:$0xff]
    %v93 = vld [vmem:[#allocation7 + $0x138] sm:$0xff]
    %v94 = vld [vmem:[#allocation7 + $0x140] sm:$0xff]
    %v95 = vld [vmem:[#allocation7 + $0x148] sm:$0xff]
    %v96 = vld [vmem:[#allocation7 + $0x150] sm:$0xff]
    %v97 = vld [vmem:[#allocation7 + $0x158] sm:$0xff]
    %v98 = vld [vmem:[#allocation7 + $0x160] sm:$0xff]
    %v99 = vld [vmem:[#allocation7 + $0x168] sm:$0xff]
    %v100 = vld [vmem:[#allocation7 + $0x170] sm:$0xff]
    %v101 = vld [vmem:[#allocation7 + $0x178] sm:$0xff]
    %v102 = vld [vmem:[#allocation7 + $0x180] sm:$0xff]
    %v103 = vld [vmem:[#allocation7 + $0x188] sm:$0xff]
    %v104 = vld [vmem:[#allocation7 + $0x190] sm:$0xff]
    %v105 = vld [vmem:[#allocation7 + $0x198] sm:$0xff]
    %v106 = vld [vmem:[#allocation7 + $0x1a0] sm:$0xff]
    %v107 = vld [vmem:[#allocation7 + $0x1a8] sm:$0xff]
    %v108 = vld [vmem:[#allocation7 + $0x1b0] sm:$0xff]
    %v109 = vld [vmem:[#allocation7 + $0x1b8] sm:$0xff]
    %v110 = vld [vmem:[#allocation7 + $0x1c0] sm:$0xff]
    %v111 = vld [vmem:[#allocation7 + $0x1c8] sm:$0xff]
    %v112 = vld [vmem:[#allocation7 + $0x1d0] sm:$0xff]
    %v113 = vld [vmem:[#allocation7 + $0x1d8] sm:$0xff]
    %v114 = vld [vmem:[#allocation7 + $0x1e0] sm:$0xff]
    %v115 = vld [vmem:[#allocation7 + $0x1e8] sm:$0xff]
    %v116 = vld [vmem:[#allocation7 + $0x1f0] sm:$0xff]
    %v117 = vld [vmem:[#allocation7 + $0x1f8] sm:$0xff]
    %v118 = vld [vmem:[#allocation7 + $0x200] sm:$0xff]
    %v119 = vld [vmem:[#allocation7 + $0x208] sm:$0xff]
    %v120 = vld [vmem:[#allocation7 + $0x210] sm:$0xff]
    %v121 = vld [vmem:[#allocation7 + $0x218] sm:$0xff]
    %v122 = vld [vmem:[#allocation7 + $0x220] sm:$0xff]
    %v123 = vld [vmem:[#allocation7 + $0x228] sm:$0xff]
    %v124 = vld [vmem:[#allocation7 + $0x230] sm:$0xff]
    %v125 = vld [vmem:[#allocation7 + $0x238] sm:$0xff]
    %v126 = vld [vmem:[#allocation7 + $0x240] sm:$0xff]
    %v127 = vld [vmem:[#allocation7 + $0x248] sm:$0xff]
    %v128 = vld [vmem:[#allocation7 + $0x250] sm:$0xff]
    %v129 = vld [vmem:[#allocation7 + $0x258] sm:$0xff]
    %v130 = vld [vmem:[#allocation7 + $0x260] sm:$0xff]
    %v131 = vld [vmem:[#allocation7 + $0x268] sm:$0xff]
    %v132 = vld [vmem:[#allocation7 + $0x270] sm:$0xff]
    %v133 = vld [vmem:[#allocation7 + $0x278] sm:$0xff]
    %v134 = vld [vmem:[#allocation7 + $0x280] sm:$0xff]
    %v135 = vld [vmem:[#allocation7 + $0x288] sm:$0xff]
    %v136 = vld [vmem:[#allocation7 + $0x290] sm:$0xff]
    %v137 = vld [vmem:[#allocation7 + $0x298] sm:$0xff]
    %v138 = vld [vmem:[#allocation7 + $0x2a0] sm:$0xff]
    %v139 = vld [vmem:[#allocation7 + $0x2a8] sm:$0xff]
    %v140 = vld [vmem:[#allocation7 + $0x2b0] sm:$0xff]
    %v141 = vld [vmem:[#allocation7 + $0x2b8] sm:$0xff]
    %v142 = vld [vmem:[#allocation7 + $0x2c0] sm:$0xff]
    %v143 = vld [vmem:[#allocation7 + $0x2c8] sm:$0xff]
    %v144 = vld [vmem:[#allocation7 + $0x2d0] sm:$0xff]
    %v145 = vld [vmem:[#allocation7 + $0x2d8] sm:$0xff]
    %v146 = vld [vmem:[#allocation7 + $0x2e0] sm:$0xff]
    %v147 = vld [vmem:[#allocation7 + $0x2e8] sm:$0xff]
    %v148 = vld [vmem:[#allocation7 + $0x2f0] sm:$0xff]
    %v149 = vld [vmem:[#allocation7 + $0x2f8] sm:$0xff]
    %v150 = vld [vmem:[#allocation7 + $0x300] sm:$0xff]
    %v151 = vld [vmem:[#allocation7 + $0x308] sm:$0xff]
    %v152 = vld [vmem:[#allocation7 + $0x310] sm:$0xff]
    %v153 = vld [vmem:[#allocation7 + $0x318] sm:$0xff]
    %v154 = vld [vmem:[#allocation7 + $0x320] sm:$0xff]
    %v155 = vld [vmem:[#allocation7 + $0x328] sm:$0xff]
    %v156 = vld [vmem:[#allocation7 + $0x330] sm:$0xff]
    %v157 = vld [vmem:[#allocation7 + $0x338] sm:$0xff]
    %v158 = vld [vmem:[#allocation7 + $0x340] sm:$0xff]
    %v159 = vld [vmem:[#allocation7 + $0x348] sm:$0xff]
    %v160 = vld [vmem:[#allocation7 + $0x350] sm:$0xff]
    %v161 = vld [vmem:[#allocation7 + $0x358] sm:$0xff]
    %v162 = vld [vmem:[#allocation7 + $0x360] sm:$0xff]
    %v163 = vld [vmem:[#allocation7 + $0x368] sm:$0xff]
    %v164 = vld [vmem:[#allocation7 + $0x370] sm:$0xff]
    %v165 = vld [vmem:[#allocation7 + $0x378] sm:$0xff]
    %v166 = vld [vmem:[#allocation7 + $0x380] sm:$0xff]
    %v167 = vld [vmem:[#allocation7 + $0x388] sm:$0xff]
    %v168 = vld [vmem:[#allocation7 + $0x390] sm:$0xff]
    %v169 = vld [vmem:[#allocation7 + $0x398] sm:$0xff]
    %v170 = vld [vmem:[#allocation7 + $0x3a0] sm:$0xff]
    %v171 = vld [vmem:[#allocation7 + $0x3a8] sm:$0xff]
    %v172 = vld [vmem:[#allocation7 + $0x3b0] sm:$0xff]
    %v173 = vld [vmem:[#allocation7 + $0x3b8] sm:$0xff]
    %v174 = vld [vmem:[#allocation7 + $0x3c0] sm:$0xff]
    %v175 = vld [vmem:[#allocation7 + $0x3c8] sm:$0xff]
    %v176 = vld [vmem:[#allocation7 + $0x3d0] sm:$0xff]
    %v177 = vld [vmem:[#allocation7 + $0x3d8] sm:$0xff]
    %v178 = vld [vmem:[#allocation7 + $0x3e0] sm:$0xff]
    %v179 = vld [vmem:[#allocation7 + $0x3e8] sm:$0xff]
    %v180 = vld [vmem:[#allocation7 + $0x3f0] sm:$0xff]
    %v181 = vld [vmem:[#allocation7 + $0x3f8] sm:$0xff]
    %v182 = vld [vmem:[#allocation7 + $0x400] sm:$0xff]
    %v183 = vld [vmem:[#allocation7 + $0x408] sm:$0xff]
    %v184 = vld [vmem:[#allocation7 + $0x410] sm:$0xff]
    %v185 = vld [vmem:[#allocation7 + $0x418] sm:$0xff]
    %v186 = vld [vmem:[#allocation7 + $0x420] sm:$0xff]
    %v187 = vld [vmem:[#allocation7 + $0x428] sm:$0xff]
    %v188 = vld [vmem:[#allocation7 + $0x430] sm:$0xff]
    %v189 = vld [vmem:[#allocation7 + $0x438] sm:$0xff]
    %v190 = vld [vmem:[#allocation7 + $0x440] sm:$0xff]
    %v191 = vld [vmem:[#allocation7 + $0x448] sm:$0xff]
    %v192 = vld [vmem:[#allocation7 + $0x450] sm:$0xff]
    %v193 = vld [vmem:[#allocation7 + $0x458] sm:$0xff]
    %v194 = vld [vmem:[#allocation7 + $0x460] sm:$0xff]
    %v195 = vld [vmem:[#allocation7 + $0x468] sm:$0xff]
    %v196 = vld [vmem:[#allocation7 + $0x470] sm:$0xff]
    %v197 = vld [vmem:[#allocation7 + $0x478] sm:$0xff]
    %v198 = vld [vmem:[#allocation7 + $0x480] sm:$0xff]
    %v199 = vld [vmem:[#allocation7 + $0x488] sm:$0xff]
    %v200 = vld [vmem:[#allocation7 + $0x490] sm:$0xff]
    %v201 = vld [vmem:[#allocation7 + $0x498] sm:$0xff]
    %v202 = vld [vmem:[#allocation7 + $0x4a0] sm:$0xff]
    %v203 = vld [vmem:[#allocation7 + $0x4a8] sm:$0xff]
    %v204 = vld [vmem:[#allocation7 + $0x4b0] sm:$0xff]
    %v205 = vld [vmem:[#allocation7 + $0x4b8] sm:$0xff]
    %v206 = vld [vmem:[#allocation7 + $0x4c0] sm:$0xff]
    %v207 = vld [vmem:[#allocation7 + $0x4c8] sm:$0xff]
    %v208 = vld [vmem:[#allocation7 + $0x4d0] sm:$0xff]
    %v209 = vld [vmem:[#allocation7 + $0x4d8] sm:$0xff]
    %v210 = vld [vmem:[#allocation7 + $0x4e0] sm:$0xff]
    %v211 = vld [vmem:[#allocation7 + $0x4e8] sm:$0xff]
    %v212 = vld [vmem:[#allocation7 + $0x4f0] sm:$0xff]
    %v213 = vld [vmem:[#allocation7 + $0x4f8] sm:$0xff]
    %v214 = vld [vmem:[#allocation7 + $0x500] sm:$0xff]
    %v215 = vld [vmem:[#allocation7 + $0x508] sm:$0xff]
    %v216 = vld [vmem:[#allocation7 + $0x510] sm:$0xff]
    %v217 = vld [vmem:[#allocation7 + $0x518] sm:$0xff]
    %v218 = vld [vmem:[#allocation7 + $0x520] sm:$0xff]
    %v219 = vld [vmem:[#allocation7 + $0x528] sm:$0xff]
    %v220 = vld [vmem:[#allocation7 + $0x530] sm:$0xff]
    %v221 = vld [vmem:[#allocation7 + $0x538] sm:$0xff]
    %v222 = vld [vmem:[#allocation7 + $0x540] sm:$0xff]
    %v223 = vld [vmem:[#allocation7 + $0x548] sm:$0xff]
    %v224 = vld [vmem:[#allocation7 + $0x550] sm:$0xff]
    %v225 = vld [vmem:[#allocation7 + $0x558] sm:$0xff]
    %v226 = vld [vmem:[#allocation7 + $0x560] sm:$0xff]
    %v227 = vld [vmem:[#allocation7 + $0x568] sm:$0xff]
    %v228 = vld [vmem:[#allocation7 + $0x570] sm:$0xff]
    %v229 = vld [vmem:[#allocation7 + $0x578] sm:$0xff]
    %v230 = vld [vmem:[#allocation7 + $0x580] sm:$0xff]
    %v231 = vld [vmem:[#allocation7 + $0x588] sm:$0xff]
    %v232 = vld [vmem:[#allocation7 + $0x590] sm:$0xff]
    %v233 = vld [vmem:[#allocation7 + $0x598] sm:$0xff]
    %v234 = vld [vmem:[#allocation7 + $0x5a0] sm:$0xff]
    %v235 = vld [vmem:[#allocation7 + $0x5a8] sm:$0xff]
    %v236 = vld [vmem:[#allocation7 + $0x5b0] sm:$0xff]
    %v237 = vld [vmem:[#allocation7 + $0x5b8] sm:$0xff]
    %v238 = vld [vmem:[#allocation7 + $0x5c0] sm:$0xff]
    %v239 = vld [vmem:[#allocation7 + $0x5c8] sm:$0xff]
    %v240 = vld [vmem:[#allocation7 + $0x5d0] sm:$0xff]
    %v241 = vld [vmem:[#allocation7 + $0x5d8] sm:$0xff]
    %v242 = vld [vmem:[#allocation7 + $0x5e0] sm:$0xff]
    %v243 = vld [vmem:[#allocation7 + $0x5e8] sm:$0xff]
    %v244 = vld [vmem:[#allocation7 + $0x5f0] sm:$0xff]
    %v245 = vld [vmem:[#allocation7 + $0x5f8] sm:$0xff]
    %v248 = vcombine.high %v52, %v52
    %v250 = vunpack.c.l.s4 1983009808
    %v251 = vunpack.c.0.s8 %v250
    %v252 = vlaneseq
    %v253 = vshrl.u32 %v252, 7
    %v254 = vsub.s32 %v251, %v253
    %v255 = vrot.slane %v52, %v254
    %v257 = vunpack.c.l.s4 1983009808
    %v258 = vunpack.c.0.s8 %v257
    %v259 = vlaneseq
    %v260 = vshrl.u32 %v259, 7
    %v261 = vsub.s32 %v258, %v260
    %v262 = vrot.slane %v248, %v261
    %v263 = vcombine.high %v255, %v255
    %v264 = vcombine.high %v262, %v262
    %v266 = vunpack.c.l.s4 1983009808
    %v267 = vunpack.c.0.s8 %v266
    %v268 = vlaneseq
    %v269 = vshrl.u32 %v268, 7
    %v270 = vsub.s32 %v267, %v269
    %v271 = vrot.slane %v53, %v270
    %v272 = vcombine.high %v271, %v271
    %v471 = vunpack.c.l.b16 %v54
    %v472 = vunpack.c.h.b16 %v54
    %v473 = vunpack.c.l.b16 %v55
    %v474 = vunpack.c.h.b16 %v55
    %v475 = vunpack.c.l.b16 %v56
    %v476 = vunpack.c.h.b16 %v56
    %v477 = vunpack.c.l.b16 %v57
    %v478 = vunpack.c.h.b16 %v57
    %v479 = vunpack.c.l.b16 %v58
    %v480 = vunpack.c.h.b16 %v58
    %v481 = vunpack.c.l.b16 %v59
    %v482 = vunpack.c.h.b16 %v59
    %v483 = vunpack.c.l.b16 %v60
    %v484 = vunpack.c.h.b16 %v60
    %v485 = vunpack.c.l.b16 %v61
    %v486 = vunpack.c.h.b16 %v61
    %v487 = vunpack.c.l.b16 %v62
    %v488 = vunpack.c.h.b16 %v62
    %v489 = vunpack.c.l.b16 %v63
    %v490 = vunpack.c.h.b16 %v63
    %v491 = vunpack.c.l.b16 %v64
    %v492 = vunpack.c.h.b16 %v64
    %v493 = vunpack.c.l.b16 %v65
    %v494 = vunpack.c.h.b16 %v65
    %v495 = vunpack.c.l.b16 %v66
    %v496 = vunpack.c.h.b16 %v66
    %v497 = vunpack.c.l.b16 %v67
    %v498 = vunpack.c.h.b16 %v67
    %v499 = vunpack.c.l.b16 %v68
    %v500 = vunpack.c.h.b16 %v68
    %v501 = vunpack.c.l.b16 %v69
    %v502 = vunpack.c.h.b16 %v69
    %v503 = vunpack.c.l.b16 %v70
    %v504 = vunpack.c.h.b16 %v70
    %v505 = vunpack.c.l.b16 %v71
    %v506 = vunpack.c.h.b16 %v71
    %v507 = vunpack.c.l.b16 %v72
    %v508 = vunpack.c.h.b16 %v72
    %v509 = vunpack.c.l.b16 %v73
    %v510 = vunpack.c.h.b16 %v73
    %v511 = vunpack.c.l.b16 %v74
    %v512 = vunpack.c.h.b16 %v74
    %v513 = vunpack.c.l.b16 %v75
    %v514 = vunpack.c.h.b16 %v75
    %v515 = vunpack.c.l.b16 %v76
    %v516 = vunpack.c.h.b16 %v76
    %v517 = vunpack.c.l.b16 %v77
    %v518 = vunpack.c.h.b16 %v77
    %v519 = vunpack.c.l.b16 %v78
    %v520 = vunpack.c.h.b16 %v78
    %v521 = vunpack.c.l.b16 %v79
    %v522 = vunpack.c.h.b16 %v79
    %v523 = vunpack.c.l.b16 %v80
    %v524 = vunpack.c.h.b16 %v80
    %v525 = vunpack.c.l.b16 %v81
    %v526 = vunpack.c.h.b16 %v81
    %v527 = vunpack.c.l.b16 %v82
    %v528 = vunpack.c.h.b16 %v82
    %v529 = vunpack.c.l.b16 %v83
    %v530 = vunpack.c.h.b16 %v83
    %v531 = vunpack.c.l.b16 %v84
    %v532 = vunpack.c.h.b16 %v84
    %v533 = vunpack.c.l.b16 %v85
    %v534 = vunpack.c.h.b16 %v85
    %v535 = vunpack.c.l.b16 %v86
    %v536 = vunpack.c.h.b16 %v86
    %v537 = vunpack.c.l.b16 %v87
    %v538 = vunpack.c.h.b16 %v87
    %v539 = vunpack.c.l.b16 %v88
    %v540 = vunpack.c.h.b16 %v88
    %v541 = vunpack.c.l.b16 %v89
    %v542 = vunpack.c.h.b16 %v89
    %v543 = vunpack.c.l.b16 %v90
    %v544 = vunpack.c.h.b16 %v90
    %v545 = vunpack.c.l.b16 %v91
    %v546 = vunpack.c.h.b16 %v91
    %v547 = vunpack.c.l.b16 %v92
    %v548 = vunpack.c.h.b16 %v92
    %v549 = vunpack.c.l.b16 %v93
    %v550 = vunpack.c.h.b16 %v93
    %v551 = vunpack.c.l.b16 %v94
    %v552 = vunpack.c.h.b16 %v94
    %v553 = vunpack.c.l.b16 %v95
    %v554 = vunpack.c.h.b16 %v95
    %v555 = vunpack.c.l.b16 %v96
    %v556 = vunpack.c.h.b16 %v96
    %v557 = vunpack.c.l.b16 %v97
    %v558 = vunpack.c.h.b16 %v97
    %v559 = vunpack.c.l.b16 %v98
    %v560 = vunpack.c.h.b16 %v98
    %v561 = vunpack.c.l.b16 %v99
    %v562 = vunpack.c.h.b16 %v99
    %v563 = vunpack.c.l.b16 %v100
    %v564 = vunpack.c.h.b16 %v100
    %v565 = vunpack.c.l.b16 %v101
    %v566 = vunpack.c.h.b16 %v101
    %v567 = vunpack.c.l.b16 %v102
    %v568 = vunpack.c.h.b16 %v102
    %v569 = vunpack.c.l.b16 %v103
    %v570 = vunpack.c.h.b16 %v103
    %v571 = vunpack.c.l.b16 %v104
    %v572 = vunpack.c.h.b16 %v104
    %v573 = vunpack.c.l.b16 %v105
    %v574 = vunpack.c.h.b16 %v105
    %v575 = vunpack.c.l.b16 %v106
    %v576 = vunpack.c.h.b16 %v106
    %v577 = vunpack.c.l.b16 %v107
    %v578 = vunpack.c.h.b16 %v107
    %v579 = vunpack.c.l.b16 %v108
    %v580 = vunpack.c.h.b16 %v108
    %v581 = vunpack.c.l.b16 %v109
    %v582 = vunpack.c.h.b16 %v109
    %v583 = vunpack.c.l.b16 %v110
    %v584 = vunpack.c.h.b16 %v110
    %v585 = vunpack.c.l.b16 %v111
    %v586 = vunpack.c.h.b16 %v111
    %v587 = vunpack.c.l.b16 %v112
    %v588 = vunpack.c.h.b16 %v112
    %v589 = vunpack.c.l.b16 %v113
    %v590 = vunpack.c.h.b16 %v113
    %v591 = vunpack.c.l.b16 %v114
    %v592 = vunpack.c.h.b16 %v114
    %v593 = vunpack.c.l.b16 %v115
    %v594 = vunpack.c.h.b16 %v115
    %v595 = vunpack.c.l.b16 %v116
    %v596 = vunpack.c.h.b16 %v116
    %v597 = vunpack.c.l.b16 %v117
    %v598 = vunpack.c.h.b16 %v117
    %v599 = vunpack.c.l.b16 %v118
    %v600 = vunpack.c.h.b16 %v118
    %v601 = vunpack.c.l.b16 %v119
    %v602 = vunpack.c.h.b16 %v119
    %v603 = vunpack.c.l.b16 %v120
    %v604 = vunpack.c.h.b16 %v120
    %v605 = vunpack.c.l.b16 %v121
    %v606 = vunpack.c.h.b16 %v121
    %v607 = vunpack.c.l.b16 %v122
    %v608 = vunpack.c.h.b16 %v122
    %v609 = vunpack.c.l.b16 %v123
    %v610 = vunpack.c.h.b16 %v123
    %v611 = vunpack.c.l.b16 %v124
    %v612 = vunpack.c.h.b16 %v124
    %v613 = vunpack.c.l.b16 %v125
    %v614 = vunpack.c.h.b16 %v125
    %v615 = vunpack.c.l.b16 %v126
    %v616 = vunpack.c.h.b16 %v126
    %v617 = vunpack.c.l.b16 %v127
    %v618 = vunpack.c.h.b16 %v127
    %v619 = vunpack.c.l.b16 %v128
    %v620 = vunpack.c.h.b16 %v128
    %v621 = vunpack.c.l.b16 %v129
    %v622 = vunpack.c.h.b16 %v129
    %v623 = vunpack.c.l.b16 %v130
    %v624 = vunpack.c.h.b16 %v130
    %v625 = vunpack.c.l.b16 %v131
    %v626 = vunpack.c.h.b16 %v131
    %v627 = vunpack.c.l.b16 %v132
    %v628 = vunpack.c.h.b16 %v132
    %v629 = vunpack.c.l.b16 %v133
    %v630 = vunpack.c.h.b16 %v133
    %v631 = vunpack.c.l.b16 %v134
    %v632 = vunpack.c.h.b16 %v134
    %v633 = vunpack.c.l.b16 %v135
    %v634 = vunpack.c.h.b16 %v135
    %v635 = vunpack.c.l.b16 %v136
    %v636 = vunpack.c.h.b16 %v136
    %v637 = vunpack.c.l.b16 %v137
    %v638 = vunpack.c.h.b16 %v137
    %v639 = vunpack.c.l.b16 %v138
    %v640 = vunpack.c.h.b16 %v138
    %v641 = vunpack.c.l.b16 %v139
    %v642 = vunpack.c.h.b16 %v139
    %v643 = vunpack.c.l.b16 %v140
    %v644 = vunpack.c.h.b16 %v140
    %v645 = vunpack.c.l.b16 %v141
    %v646 = vunpack.c.h.b16 %v141
    %v647 = vunpack.c.l.b16 %v142
    %v648 = vunpack.c.h.b16 %v142
    %v649 = vunpack.c.l.b16 %v143
    %v650 = vunpack.c.h.b16 %v143
    %v651 = vunpack.c.l.b16 %v144
    %v652 = vunpack.c.h.b16 %v144
    %v653 = vunpack.c.l.b16 %v145
    %v654 = vunpack.c.h.b16 %v145
    %v655 = vunpack.c.l.b16 %v146
    %v656 = vunpack.c.h.b16 %v146
    %v657 = vunpack.c.l.b16 %v147
    %v658 = vunpack.c.h.b16 %v147
    %v659 = vunpack.c.l.b16 %v148
    %v660 = vunpack.c.h.b16 %v148
    %v661 = vunpack.c.l.b16 %v149
    %v662 = vunpack.c.h.b16 %v149
    %v663 = vunpack.c.l.b16 %v150
    %v664 = vunpack.c.h.b16 %v150
    %v665 = vunpack.c.l.b16 %v151
    %v666 = vunpack.c.h.b16 %v151
    %v667 = vunpack.c.l.b16 %v152
    %v668 = vunpack.c.h.b16 %v152
    %v669 = vunpack.c.l.b16 %v153
    %v670 = vunpack.c.h.b16 %v153
    %v671 = vunpack.c.l.b16 %v154
    %v672 = vunpack.c.h.b16 %v154
    %v673 = vunpack.c.l.b16 %v155
    %v674 = vunpack.c.h.b16 %v155
    %v675 = vunpack.c.l.b16 %v156
    %v676 = vunpack.c.h.b16 %v156
    %v677 = vunpack.c.l.b16 %v157
    %v678 = vunpack.c.h.b16 %v157
    %v679 = vunpack.c.l.b16 %v158
    %v680 = vunpack.c.h.b16 %v158
    %v681 = vunpack.c.l.b16 %v159
    %v682 = vunpack.c.h.b16 %v159
    %v683 = vunpack.c.l.b16 %v160
    %v684 = vunpack.c.h.b16 %v160
    %v685 = vunpack.c.l.b16 %v161
    %v686 = vunpack.c.h.b16 %v161
    %v687 = vunpack.c.l.b16 %v162
    %v688 = vunpack.c.h.b16 %v162
    %v689 = vunpack.c.l.b16 %v163
    %v690 = vunpack.c.h.b16 %v163
    %v691 = vunpack.c.l.b16 %v164
    %v692 = vunpack.c.h.b16 %v164
    %v693 = vunpack.c.l.b16 %v165
    %v694 = vunpack.c.h.b16 %v165
    %v695 = vunpack.c.l.b16 %v166
    %v696 = vunpack.c.h.b16 %v166
    %v697 = vunpack.c.l.b16 %v167
    %v698 = vunpack.c.h.b16 %v167
    %v699 = vunpack.c.l.b16 %v168
    %v700 = vunpack.c.h.b16 %v168
    %v701 = vunpack.c.l.b16 %v169
    %v702 = vunpack.c.h.b16 %v169
    %v703 = vunpack.c.l.b16 %v170
    %v704 = vunpack.c.h.b16 %v170
    %v705 = vunpack.c.l.b16 %v171
    %v706 = vunpack.c.h.b16 %v171
    %v707 = vunpack.c.l.b16 %v172
    %v708 = vunpack.c.h.b16 %v172
    %v709 = vunpack.c.l.b16 %v173
    %v710 = vunpack.c.h.b16 %v173
    %v711 = vunpack.c.l.b16 %v174
    %v712 = vunpack.c.h.b16 %v174
    %v713 = vunpack.c.l.b16 %v175
    %v714 = vunpack.c.h.b16 %v175
    %v715 = vunpack.c.l.b16 %v176
    %v716 = vunpack.c.h.b16 %v176
    %v717 = vunpack.c.l.b16 %v177
    %v718 = vunpack.c.h.b16 %v177
    %v719 = vunpack.c.l.b16 %v178
    %v720 = vunpack.c.h.b16 %v178
    %v721 = vunpack.c.l.b16 %v179
    %v722 = vunpack.c.h.b16 %v179
    %v723 = vunpack.c.l.b16 %v180
    %v724 = vunpack.c.h.b16 %v180
    %v725 = vunpack.c.l.b16 %v181
    %v726 = vunpack.c.h.b16 %v181
    %v727 = vunpack.c.l.b16 %v182
    %v728 = vunpack.c.h.b16 %v182
    %v729 = vunpack.c.l.b16 %v183
    %v730 = vunpack.c.h.b16 %v183
    %v731 = vunpack.c.l.b16 %v184
    %v732 = vunpack.c.h.b16 %v184
    %v733 = vunpack.c.l.b16 %v185
    %v734 = vunpack.c.h.b16 %v185
    %v735 = vunpack.c.l.b16 %v186
    %v736 = vunpack.c.h.b16 %v186
    %v737 = vunpack.c.l.b16 %v187
    %v738 = vunpack.c.h.b16 %v187
    %v739 = vunpack.c.l.b16 %v188
    %v740 = vunpack.c.h.b16 %v188
    %v741 = vunpack.c.l.b16 %v189
    %v742 = vunpack.c.h.b16 %v189
    %v743 = vunpack.c.l.b16 %v190
    %v744 = vunpack.c.h.b16 %v190
    %v745 = vunpack.c.l.b16 %v191
    %v746 = vunpack.c.h.b16 %v191
    %v747 = vunpack.c.l.b16 %v192
    %v748 = vunpack.c.h.b16 %v192
    %v749 = vunpack.c.l.b16 %v193
    %v750 = vunpack.c.h.b16 %v193
    %v751 = vunpack.c.l.b16 %v194
    %v752 = vunpack.c.h.b16 %v194
    %v753 = vunpack.c.l.b16 %v195
    %v754 = vunpack.c.h.b16 %v195
    %v755 = vunpack.c.l.b16 %v196
    %v756 = vunpack.c.h.b16 %v196
    %v757 = vunpack.c.l.b16 %v197
    %v758 = vunpack.c.h.b16 %v197
    %v759 = vunpack.c.l.b16 %v198
    %v760 = vunpack.c.h.b16 %v198
    %v761 = vunpack.c.l.b16 %v199
    %v762 = vunpack.c.h.b16 %v199
    %v763 = vunpack.c.l.b16 %v200
    %v764 = vunpack.c.h.b16 %v200
    %v765 = vunpack.c.l.b16 %v201
    %v766 = vunpack.c.h.b16 %v201
    %v767 = vunpack.c.l.b16 %v202
    %v768 = vunpack.c.h.b16 %v202
    %v769 = vunpack.c.l.b16 %v203
    %v770 = vunpack.c.h.b16 %v203
    %v771 = vunpack.c.l.b16 %v204
    %v772 = vunpack.c.h.b16 %v204
    %v773 = vunpack.c.l.b16 %v205
    %v774 = vunpack.c.h.b16 %v205
    %v775 = vunpack.c.l.b16 %v206
    %v776 = vunpack.c.h.b16 %v206
    %v777 = vunpack.c.l.b16 %v207
    %v778 = vunpack.c.h.b16 %v207
    %v779 = vunpack.c.l.b16 %v208
    %v780 = vunpack.c.h.b16 %v208
    %v781 = vunpack.c.l.b16 %v209
    %v782 = vunpack.c.h.b16 %v209
    %v783 = vunpack.c.l.b16 %v210
    %v784 = vunpack.c.h.b16 %v210
    %v785 = vunpack.c.l.b16 %v211
    %v786 = vunpack.c.h.b16 %v211
    %v787 = vunpack.c.l.b16 %v212
    %v788 = vunpack.c.h.b16 %v212
    %v789 = vunpack.c.l.b16 %v213
    %v790 = vunpack.c.h.b16 %v213
    %v791 = vunpack.c.l.b16 %v214
    %v792 = vunpack.c.h.b16 %v214
    %v793 = vunpack.c.l.b16 %v215
    %v794 = vunpack.c.h.b16 %v215
    %v795 = vunpack.c.l.b16 %v216
    %v796 = vunpack.c.h.b16 %v216
    %v797 = vunpack.c.l.b16 %v217
    %v798 = vunpack.c.h.b16 %v217
    %v799 = vunpack.c.l.b16 %v218
    %v800 = vunpack.c.h.b16 %v218
    %v801 = vunpack.c.l.b16 %v219
    %v802 = vunpack.c.h.b16 %v219
    %v803 = vunpack.c.l.b16 %v220
    %v804 = vunpack.c.h.b16 %v220
    %v805 = vunpack.c.l.b16 %v221
    %v806 = vunpack.c.h.b16 %v221
    %v807 = vunpack.c.l.b16 %v222
    %v808 = vunpack.c.h.b16 %v222
    %v809 = vunpack.c.l.b16 %v223
    %v810 = vunpack.c.h.b16 %v223
    %v811 = vunpack.c.l.b16 %v224
    %v812 = vunpack.c.h.b16 %v224
    %v813 = vunpack.c.l.b16 %v225
    %v814 = vunpack.c.h.b16 %v225
    %v815 = vunpack.c.l.b16 %v226
    %v816 = vunpack.c.h.b16 %v226
    %v817 = vunpack.c.l.b16 %v227
    %v818 = vunpack.c.h.b16 %v227
    %v819 = vunpack.c.l.b16 %v228
    %v820 = vunpack.c.h.b16 %v228
    %v821 = vunpack.c.l.b16 %v229
    %v822 = vunpack.c.h.b16 %v229
    %v823 = vunpack.c.l.b16 %v230
    %v824 = vunpack.c.h.b16 %v230
    %v825 = vunpack.c.l.b16 %v231
    %v826 = vunpack.c.h.b16 %v231
    %v827 = vunpack.c.l.b16 %v232
    %v828 = vunpack.c.h.b16 %v232
    %v829 = vunpack.c.l.b16 %v233
    %v830 = vunpack.c.h.b16 %v233
    %v831 = vunpack.c.l.b16 %v234
    %v832 = vunpack.c.h.b16 %v234
    %v833 = vunpack.c.l.b16 %v235
    %v834 = vunpack.c.h.b16 %v235
    %v835 = vunpack.c.l.b16 %v236
    %v836 = vunpack.c.h.b16 %v236
    %v837 = vunpack.c.l.b16 %v237
    %v838 = vunpack.c.h.b16 %v237
    %v839 = vunpack.c.l.b16 %v238
    %v840 = vunpack.c.h.b16 %v238
    %v841 = vunpack.c.l.b16 %v239
    %v842 = vunpack.c.h.b16 %v239
    %v843 = vunpack.c.l.b16 %v240
    %v844 = vunpack.c.h.b16 %v240
    %v845 = vunpack.c.l.b16 %v241
    %v846 = vunpack.c.h.b16 %v241
    %v847 = vunpack.c.l.b16 %v242
    %v848 = vunpack.c.h.b16 %v242
    %v849 = vunpack.c.l.b16 %v243
    %v850 = vunpack.c.h.b16 %v243
    %v851 = vunpack.c.l.b16 %v244
    %v852 = vunpack.c.h.b16 %v244
    %v853 = vunpack.c.l.b16 %v245
    %v854 = vunpack.c.h.b16 %v245
    %v855 = vpack.c.b16 %v475, %v471
    %v856 = vpack.c.b16 %v476, %v472
    %v857 = vpack.c.b16 %v477, %v473
    %v858 = vpack.c.b16 %v478, %v474
    %v859 = vpack.c.b16 %v483, %v479
    %v860 = vpack.c.b16 %v484, %v480
    %v861 = vpack.c.b16 %v485, %v481
    %v862 = vpack.c.b16 %v486, %v482
    %v863 = vpack.c.b16 %v491, %v487
    %v864 = vpack.c.b16 %v492, %v488
    %v865 = vpack.c.b16 %v493, %v489
    %v866 = vpack.c.b16 %v494, %v490
    %v867 = vpack.c.b16 %v499, %v495
    %v868 = vpack.c.b16 %v500, %v496
    %v869 = vpack.c.b16 %v501, %v497
    %v870 = vpack.c.b16 %v502, %v498
    %v871 = vpack.c.b16 %v507, %v503
    %v872 = vpack.c.b16 %v508, %v504
    %v873 = vpack.c.b16 %v509, %v505
    %v874 = vpack.c.b16 %v510, %v506
    %v875 = vpack.c.b16 %v515, %v511
    %v876 = vpack.c.b16 %v516, %v512
    %v877 = vpack.c.b16 %v517, %v513
    %v878 = vpack.c.b16 %v518, %v514
    %v879 = vpack.c.b16 %v523, %v519
    %v880 = vpack.c.b16 %v524, %v520
    %v881 = vpack.c.b16 %v525, %v521
    %v882 = vpack.c.b16 %v526, %v522
    %v883 = vpack.c.b16 %v531, %v527
    %v884 = vpack.c.b16 %v532, %v528
    %v885 = vpack.c.b16 %v533, %v529
    %v886 = vpack.c.b16 %v534, %v530
    %v887 = vpack.c.b16 %v539, %v535
    %v888 = vpack.c.b16 %v540, %v536
    %v889 = vpack.c.b16 %v541, %v537
    %v890 = vpack.c.b16 %v542, %v538
    %v891 = vpack.c.b16 %v547, %v543
    %v892 = vpack.c.b16 %v548, %v544
    %v893 = vpack.c.b16 %v549, %v545
    %v894 = vpack.c.b16 %v550, %v546
    %v895 = vpack.c.b16 %v555, %v551
    %v896 = vpack.c.b16 %v556, %v552
    %v897 = vpack.c.b16 %v557, %v553
    %v898 = vpack.c.b16 %v558, %v554
    %v899 = vpack.c.b16 %v563, %v559
    %v900 = vpack.c.b16 %v564, %v560
    %v901 = vpack.c.b16 %v565, %v561
    %v902 = vpack.c.b16 %v566, %v562
    %v903 = vpack.c.b16 %v571, %v567
    %v904 = vpack.c.b16 %v572, %v568
    %v905 = vpack.c.b16 %v573, %v569
    %v906 = vpack.c.b16 %v574, %v570
    %v907 = vpack.c.b16 %v579, %v575
    %v908 = vpack.c.b16 %v580, %v576
    %v909 = vpack.c.b16 %v581, %v577
    %v910 = vpack.c.b16 %v582, %v578
    %v911 = vpack.c.b16 %v587, %v583
    %v912 = vpack.c.b16 %v588, %v584
    %v913 = vpack.c.b16 %v589, %v585
    %v914 = vpack.c.b16 %v590, %v586
    %v915 = vpack.c.b16 %v595, %v591
    %v916 = vpack.c.b16 %v596, %v592
    %v917 = vpack.c.b16 %v597, %v593
    %v918 = vpack.c.b16 %v598, %v594
    %v919 = vpack.c.b16 %v603, %v599
    %v920 = vpack.c.b16 %v604, %v600
    %v921 = vpack.c.b16 %v605, %v601
    %v922 = vpack.c.b16 %v606, %v602
    %v923 = vpack.c.b16 %v611, %v607
    %v924 = vpack.c.b16 %v612, %v608
    %v925 = vpack.c.b16 %v613, %v609
    %v926 = vpack.c.b16 %v614, %v610
    %v927 = vpack.c.b16 %v619, %v615
    %v928 = vpack.c.b16 %v620, %v616
    %v929 = vpack.c.b16 %v621, %v617
    %v930 = vpack.c.b16 %v622, %v618
    %v931 = vpack.c.b16 %v627, %v623
    %v932 = vpack.c.b16 %v628, %v624
    %v933 = vpack.c.b16 %v629, %v625
    %v934 = vpack.c.b16 %v630, %v626
    %v935 = vpack.c.b16 %v635, %v631
    %v936 = vpack.c.b16 %v636, %v632
    %v937 = vpack.c.b16 %v637, %v633
    %v938 = vpack.c.b16 %v638, %v634
    %v939 = vpack.c.b16 %v643, %v639
    %v940 = vpack.c.b16 %v644, %v640
    %v941 = vpack.c.b16 %v645, %v641
    %v942 = vpack.c.b16 %v646, %v642
    %v943 = vpack.c.b16 %v651, %v647
    %v944 = vpack.c.b16 %v652, %v648
    %v945 = vpack.c.b16 %v653, %v649
    %v946 = vpack.c.b16 %v654, %v650
    %v947 = vpack.c.b16 %v659, %v655
    %v948 = vpack.c.b16 %v660, %v656
    %v949 = vpack.c.b16 %v661, %v657
    %v950 = vpack.c.b16 %v662, %v658
    %v951 = vpack.c.b16 %v667, %v663
    %v952 = vpack.c.b16 %v668, %v664
    %v953 = vpack.c.b16 %v669, %v665
    %v954 = vpack.c.b16 %v670, %v666
    %v955 = vpack.c.b16 %v675, %v671
    %v956 = vpack.c.b16 %v676, %v672
    %v957 = vpack.c.b16 %v677, %v673
    %v958 = vpack.c.b16 %v678, %v674
    %v959 = vpack.c.b16 %v683, %v679
    %v960 = vpack.c.b16 %v684, %v680
    %v961 = vpack.c.b16 %v685, %v681
    %v962 = vpack.c.b16 %v686, %v682
    %v963 = vpack.c.b16 %v691, %v687
    %v964 = vpack.c.b16 %v692, %v688
    %v965 = vpack.c.b16 %v693, %v689
    %v966 = vpack.c.b16 %v694, %v690
    %v967 = vpack.c.b16 %v699, %v695
    %v968 = vpack.c.b16 %v700, %v696
    %v969 = vpack.c.b16 %v701, %v697
    %v970 = vpack.c.b16 %v702, %v698
    %v971 = vpack.c.b16 %v707, %v703
    %v972 = vpack.c.b16 %v708, %v704
    %v973 = vpack.c.b16 %v709, %v705
    %v974 = vpack.c.b16 %v710, %v706
    %v975 = vpack.c.b16 %v715, %v711
    %v976 = vpack.c.b16 %v716, %v712
    %v977 = vpack.c.b16 %v717, %v713
    %v978 = vpack.c.b16 %v718, %v714
    %v979 = vpack.c.b16 %v723, %v719
    %v980 = vpack.c.b16 %v724, %v720
    %v981 = vpack.c.b16 %v725, %v721
    %v982 = vpack.c.b16 %v726, %v722
    %v983 = vpack.c.b16 %v731, %v727
    %v984 = vpack.c.b16 %v732, %v728
    %v985 = vpack.c.b16 %v733, %v729
    %v986 = vpack.c.b16 %v734, %v730
    %v987 = vpack.c.b16 %v739, %v735
    %v988 = vpack.c.b16 %v740, %v736
    %v989 = vpack.c.b16 %v741, %v737
    %v990 = vpack.c.b16 %v742, %v738
    %v991 = vpack.c.b16 %v747, %v743
    %v992 = vpack.c.b16 %v748, %v744
    %v993 = vpack.c.b16 %v749, %v745
    %v994 = vpack.c.b16 %v750, %v746
    %v995 = vpack.c.b16 %v755, %v751
    %v996 = vpack.c.b16 %v756, %v752
    %v997 = vpack.c.b16 %v757, %v753
    %v998 = vpack.c.b16 %v758, %v754
    %v999 = vpack.c.b16 %v763, %v759
    %v1000 = vpack.c.b16 %v764, %v760
    %v1001 = vpack.c.b16 %v765, %v761
    %v1002 = vpack.c.b16 %v766, %v762
    %v1003 = vpack.c.b16 %v771, %v767
    %v1004 = vpack.c.b16 %v772, %v768
    %v1005 = vpack.c.b16 %v773, %v769
    %v1006 = vpack.c.b16 %v774, %v770
    %v1007 = vpack.c.b16 %v779, %v775
    %v1008 = vpack.c.b16 %v780, %v776
    %v1009 = vpack.c.b16 %v781, %v777
    %v1010 = vpack.c.b16 %v782, %v778
    %v1011 = vpack.c.b16 %v787, %v783
    %v1012 = vpack.c.b16 %v788, %v784
    %v1013 = vpack.c.b16 %v789, %v785
    %v1014 = vpack.c.b16 %v790, %v786
    %v1015 = vpack.c.b16 %v795, %v791
    %v1016 = vpack.c.b16 %v796, %v792
    %v1017 = vpack.c.b16 %v797, %v793
    %v1018 = vpack.c.b16 %v798, %v794
    %v1019 = vpack.c.b16 %v803, %v799
    %v1020 = vpack.c.b16 %v804, %v800
    %v1021 = vpack.c.b16 %v805, %v801
    %v1022 = vpack.c.b16 %v806, %v802
    %v1023 = vpack.c.b16 %v811, %v807
    %v1024 = vpack.c.b16 %v812, %v808
    %v1025 = vpack.c.b16 %v813, %v809
    %v1026 = vpack.c.b16 %v814, %v810
    %v1027 = vpack.c.b16 %v819, %v815
    %v1028 = vpack.c.b16 %v820, %v816
    %v1029 = vpack.c.b16 %v821, %v817
    %v1030 = vpack.c.b16 %v822, %v818
    %v1031 = vpack.c.b16 %v827, %v823
    %v1032 = vpack.c.b16 %v828, %v824
    %v1033 = vpack.c.b16 %v829, %v825
    %v1034 = vpack.c.b16 %v830, %v826
    %v1035 = vpack.c.b16 %v835, %v831
    %v1036 = vpack.c.b16 %v836, %v832
    %v1037 = vpack.c.b16 %v837, %v833
    %v1038 = vpack.c.b16 %v838, %v834
    %v1039 = vpack.c.b16 %v843, %v839
    %v1040 = vpack.c.b16 %v844, %v840
    %v1041 = vpack.c.b16 %v845, %v841
    %v1042 = vpack.c.b16 %v846, %v842
    %v1043 = vpack.c.b16 %v851, %v847
    %v1044 = vpack.c.b16 %v852, %v848
    %v1045 = vpack.c.b16 %v853, %v849
    %v1046 = vpack.c.b16 %v854, %v850
    %1239 = vmatprep.subr.bf16.mxu0 %v884
    %1240 = vmatpush1.bf16.msra.mxu0 %v883
    %1241 = vmatprep.subr.bf16.mxu0 %v880
    %1242 = vmatpush1.bf16.msra.mxu0 %v879
    %1243 = vmatprep.subr.bf16.mxu0 %v876
    %1244 = vmatpush1.bf16.msra.mxu0 %v875
    %1245 = vmatprep.subr.bf16.mxu0 %v872
    %1246 = vmatpush1.bf16.msra.mxu0 %v871
    %1247 = vmatprep.subr.bf16.mxu0 %v868
    %1248 = vmatpush1.bf16.msra.mxu0 %v867
    %1249 = vmatprep.subr.bf16.mxu0 %v864
    %1250 = vmatpush1.bf16.msra.mxu0 %v863
    %1251 = vmatprep.subr.bf16.mxu0 %v860
    %1252 = vmatpush1.bf16.msra.mxu0 %v859
    %1253 = vmatprep.subr.bf16.mxu0 %v856
    %1254 = vmatpush1.bf16.msra.mxu0 %v855
    %1255 = vmatprep.subr.bf16.mxu0 %v916
    %1256 = vmatpush2.bf16.msra.mxu0 %v915
    %1257 = vmatprep.subr.bf16.mxu0 %v912
    %1258 = vmatpush2.bf16.msra.mxu0 %v911
    %1259 = vmatprep.subr.bf16.mxu0 %v908
    %1260 = vmatpush2.bf16.msra.mxu0 %v907
    %1261 = vmatprep.subr.bf16.mxu0 %v904
    %1262 = vmatpush2.bf16.msra.mxu0 %v903
    %1263 = vmatprep.subr.bf16.mxu0 %v900
    %1264 = vmatpush2.bf16.msra.mxu0 %v899
    %1265 = vmatprep.subr.bf16.mxu0 %v896
    %1266 = vmatpush2.bf16.msra.mxu0 %v895
    %1267 = vmatprep.subr.bf16.mxu0 %v892
    %1268 = vmatpush2.bf16.msra.mxu0 %v891
    %1269 = vmatprep.subr.bf16.mxu0 %v888
    %1270 = vmatpush2.bf16.msra.mxu0 %v887
    %1271 = vmatprep.mubr.bf16.mxu0 %v263
    %1272 = vmatmul.mubr.bf16.gmra.mxu0 %v255
    %v1273 = vpop.f32.mrf.mxu0
    %v1274 = vadd.f32 0.0, %v1273
    %v1275 = vpop.f32.mrf.mxu0
    %v1276 = vadd.f32 0.0, %v1275
    %v1277 = vpop.f32.mrf.mxu0
    %v1278 = vpop.f32.mrf.mxu0
    %1279 = vdwg.mxu0
    %1280 = vmatprep.subr.bf16.mxu0 %v948
    %1281 = vmatpush1.bf16.msra.mxu0 %v947
    %1282 = vmatprep.subr.bf16.mxu0 %v944
    %1283 = vmatpush1.bf16.msra.mxu0 %v943
    %1284 = vmatprep.subr.bf16.mxu0 %v940
    %1285 = vmatpush1.bf16.msra.mxu0 %v939
    %1286 = vmatprep.subr.bf16.mxu0 %v936
    %1287 = vmatpush1.bf16.msra.mxu0 %v935
    %1288 = vmatprep.subr.bf16.mxu0 %v932
    %1289 = vmatpush1.bf16.msra.mxu0 %v931
    %1290 = vmatprep.subr.bf16.mxu0 %v928
    %1291 = vmatpush1.bf16.msra.mxu0 %v927
    %1292 = vmatprep.subr.bf16.mxu0 %v924
    %1293 = vmatpush1.bf16.msra.mxu0 %v923
    %1294 = vmatprep.subr.bf16.mxu0 %v920
    %1295 = vmatpush1.bf16.msra.mxu0 %v919
    %1296 = vmatprep.subr.bf16.mxu0 %v980
    %1297 = vmatpush2.bf16.msra.mxu0 %v979
    %1298 = vmatprep.subr.bf16.mxu0 %v976
    %1299 = vmatpush2.bf16.msra.mxu0 %v975
    %1300 = vmatprep.subr.bf16.mxu0 %v972
    %1301 = vmatpush2.bf16.msra.mxu0 %v971
    %1302 = vmatprep.subr.bf16.mxu0 %v968
    %1303 = vmatpush2.bf16.msra.mxu0 %v967
    %1304 = vmatprep.subr.bf16.mxu0 %v964
    %1305 = vmatpush2.bf16.msra.mxu0 %v963
    %1306 = vmatprep.subr.bf16.mxu0 %v960
    %1307 = vmatpush2.bf16.msra.mxu0 %v959
    %1308 = vmatprep.subr.bf16.mxu0 %v956
    %1309 = vmatpush2.bf16.msra.mxu0 %v955
    %1310 = vmatprep.subr.bf16.mxu0 %v952
    %1311 = vmatpush2.bf16.msra.mxu0 %v951
    %1312 = vmatprep.mubr.bf16.mxu0 %v264
    %1313 = vmatmul.mubr.bf16.gmra.mxu0 %v262
    %v1314 = vpop.f32.mrf.mxu0
    %v1315 = vadd.f32 %v1274, %v1314
    %v1316 = vpop.f32.mrf.mxu0
    %v1317 = vadd.f32 %v1276, %v1316
    %v1318 = vpop.f32.mrf.mxu0
    %v1319 = vpop.f32.mrf.mxu0
    %1320 = vdwg.mxu0
    %1321 = vmatprep.subr.bf16.mxu0 %v1012
    %1322 = vmatpush1.bf16.msra.mxu0 %v1011
    %1323 = vmatprep.subr.bf16.mxu0 %v1008
    %1324 = vmatpush1.bf16.msra.mxu0 %v1007
    %1325 = vmatprep.subr.bf16.mxu0 %v1004
    %1326 = vmatpush1.bf16.msra.mxu0 %v1003
    %1327 = vmatprep.subr.bf16.mxu0 %v1000
    %1328 = vmatpush1.bf16.msra.mxu0 %v999
    %1329 = vmatprep.subr.bf16.mxu0 %v996
    %1330 = vmatpush1.bf16.msra.mxu0 %v995
    %1331 = vmatprep.subr.bf16.mxu0 %v992
    %1332 = vmatpush1.bf16.msra.mxu0 %v991
    %1333 = vmatprep.subr.bf16.mxu0 %v988
    %1334 = vmatpush1.bf16.msra.mxu0 %v987
    %1335 = vmatprep.subr.bf16.mxu0 %v984
    %1336 = vmatpush1.bf16.msra.mxu0 %v983
    %1337 = vmatprep.subr.bf16.mxu0 %v1044
    %1338 = vmatpush2.bf16.msra.mxu0 %v1043
    %1339 = vmatprep.subr.bf16.mxu0 %v1040
    %1340 = vmatpush2.bf16.msra.mxu0 %v1039
    %1341 = vmatprep.subr.bf16.mxu0 %v1036
    %1342 = vmatpush2.bf16.msra.mxu0 %v1035
    %1343 = vmatprep.subr.bf16.mxu0 %v1032
    %1344 = vmatpush2.bf16.msra.mxu0 %v1031
    %1345 = vmatprep.subr.bf16.mxu0 %v1028
    %1346 = vmatpush2.bf16.msra.mxu0 %v1027
    %1347 = vmatprep.subr.bf16.mxu0 %v1024
    %1348 = vmatpush2.bf16.msra.mxu0 %v1023
    %1349 = vmatprep.subr.bf16.mxu0 %v1020
    %1350 = vmatpush2.bf16.msra.mxu0 %v1019
    %1351 = vmatprep.subr.bf16.mxu0 %v1016
    %1352 = vmatpush2.bf16.msra.mxu0 %v1015
    %1353 = vmatprep.mubr.bf16.mxu0 %v272
    %1354 = vmatmul.mubr.bf16.gmra.mxu0 %v271
    %v1355 = vpop.f32.mrf.mxu0
    %v1356 = vadd.f32 %v1315, %v1355
    %v1357 = vpop.f32.mrf.mxu0
    %v1358 = vadd.f32 %v1317, %v1357
    %v1359 = vpop.f32.mrf.mxu0
    %v1360 = vpop.f32.mrf.mxu0
    %1361 = vdwg.mxu0
    %1362 = vmatprep.subr.bf16.mxu0 %v886
    %1363 = vmatpush1.bf16.msra.mxu0 %v885
    %1364 = vmatprep.subr.bf16.mxu0 %v882
    %1365 = vmatpush1.bf16.msra.mxu0 %v881
    %1366 = vmatprep.subr.bf16.mxu0 %v878
    %1367 = vmatpush1.bf16.msra.mxu0 %v877
    %1368 = vmatprep.subr.bf16.mxu0 %v874
    %1369 = vmatpush1.bf16.msra.mxu0 %v873
    %1370 = vmatprep.subr.bf16.mxu0 %v870
    %1371 = vmatpush1.bf16.msra.mxu0 %v869
    %1372 = vmatprep.subr.bf16.mxu0 %v866
    %1373 = vmatpush1.bf16.msra.mxu0 %v865
    %1374 = vmatprep.subr.bf16.mxu0 %v862
    %1375 = vmatpush1.bf16.msra.mxu0 %v861
    %1376 = vmatprep.subr.bf16.mxu0 %v858
    %1377 = vmatpush1.bf16.msra.mxu0 %v857
    %1378 = vmatprep.subr.bf16.mxu0 %v918
    %1379 = vmatpush2.bf16.msra.mxu0 %v917
    %1380 = vmatprep.subr.bf16.mxu0 %v914
    %1381 = vmatpush2.bf16.msra.mxu0 %v913
    %1382 = vmatprep.subr.bf16.mxu0 %v910
    %1383 = vmatpush2.bf16.msra.mxu0 %v909
    %1384 = vmatprep.subr.bf16.mxu0 %v906
    %1385 = vmatpush2.bf16.msra.mxu0 %v905
    %1386 = vmatprep.subr.bf16.mxu0 %v902
    %1387 = vmatpush2.bf16.msra.mxu0 %v901
    %1388 = vmatprep.subr.bf16.mxu0 %v898
    %1389 = vmatpush2.bf16.msra.mxu0 %v897
    %1390 = vmatprep.subr.bf16.mxu0 %v894
    %1391 = vmatpush2.bf16.msra.mxu0 %v893
    %1392 = vmatprep.subr.bf16.mxu0 %v890
    %1393 = vmatpush2.bf16.msra.mxu0 %v889
    %1394 = vmatprep.mubr.bf16.mxu0 %v263
    %1395 = vmatmul.mubr.bf16.gmra.mxu0 %v255
    %v1396 = vpop.f32.mrf.mxu0
    %v1397 = vadd.f32 0.0, %v1396
    %v1398 = vpop.f32.mrf.mxu0
    %v1399 = vadd.f32 0.0, %v1398
    %v1400 = vpop.f32.mrf.mxu0
    %v1401 = vpop.f32.mrf.mxu0
    %1402 = vdwg.mxu0
    %1403 = vmatprep.subr.bf16.mxu0 %v950
    %1404 = vmatpush1.bf16.msra.mxu0 %v949
    %1405 = vmatprep.subr.bf16.mxu0 %v946
    %1406 = vmatpush1.bf16.msra.mxu0 %v945
    %1407 = vmatprep.subr.bf16.mxu0 %v942
    %1408 = vmatpush1.bf16.msra.mxu0 %v941
    %1409 = vmatprep.subr.bf16.mxu0 %v938
    %1410 = vmatpush1.bf16.msra.mxu0 %v937
    %1411 = vmatprep.subr.bf16.mxu0 %v934
    %1412 = vmatpush1.bf16.msra.mxu0 %v933
    %1413 = vmatprep.subr.bf16.mxu0 %v930
    %1414 = vmatpush1.bf16.msra.mxu0 %v929
    %1415 = vmatprep.subr.bf16.mxu0 %v926
    %1416 = vmatpush1.bf16.msra.mxu0 %v925
    %1417 = vmatprep.subr.bf16.mxu0 %v922
    %1418 = vmatpush1.bf16.msra.mxu0 %v921
    %1419 = vmatprep.subr.bf16.mxu0 %v982
    %1420 = vmatpush2.bf16.msra.mxu0 %v981
    %1421 = vmatprep.subr.bf16.mxu0 %v978
    %1422 = vmatpush2.bf16.msra.mxu0 %v977
    %1423 = vmatprep.subr.bf16.mxu0 %v974
    %1424 = vmatpush2.bf16.msra.mxu0 %v973
    %1425 = vmatprep.subr.bf16.mxu0 %v970
    %1426 = vmatpush2.bf16.msra.mxu0 %v969
    %1427 = vmatprep.subr.bf16.mxu0 %v966
    %1428 = vmatpush2.bf16.msra.mxu0 %v965
    %1429 = vmatprep.subr.bf16.mxu0 %v962
    %1430 = vmatpush2.bf16.msra.mxu0 %v961
    %1431 = vmatprep.subr.bf16.mxu0 %v958
    %1432 = vmatpush2.bf16.msra.mxu0 %v957
    %1433 = vmatprep.subr.bf16.mxu0 %v954
    %1434 = vmatpush2.bf16.msra.mxu0 %v953
    %1435 = vmatprep.mubr.bf16.mxu0 %v264
    %1436 = vmatmul.mubr.bf16.gmra.mxu0 %v262
    %v1437 = vpop.f32.mrf.mxu0
    %v1438 = vadd.f32 %v1397, %v1437
    %v1439 = vpop.f32.mrf.mxu0
    %v1440 = vadd.f32 %v1399, %v1439
    %v1441 = vpop.f32.mrf.mxu0
    %v1442 = vpop.f32.mrf.mxu0
    %1443 = vdwg.mxu0
    %1444 = vmatprep.subr.bf16.mxu0 %v1014
    %1445 = vmatpush1.bf16.msra.mxu0 %v1013
    %1446 = vmatprep.subr.bf16.mxu0 %v1010
    %1447 = vmatpush1.bf16.msra.mxu0 %v1009
    %1448 = vmatprep.subr.bf16.mxu0 %v1006
    %1449 = vmatpush1.bf16.msra.mxu0 %v1005
    %1450 = vmatprep.subr.bf16.mxu0 %v1002
    %1451 = vmatpush1.bf16.msra.mxu0 %v1001
    %1452 = vmatprep.subr.bf16.mxu0 %v998
    %1453 = vmatpush1.bf16.msra.mxu0 %v997
    %1454 = vmatprep.subr.bf16.mxu0 %v994
    %1455 = vmatpush1.bf16.msra.mxu0 %v993
    %1456 = vmatprep.subr.bf16.mxu0 %v990
    %1457 = vmatpush1.bf16.msra.mxu0 %v989
    %1458 = vmatprep.subr.bf16.mxu0 %v986
    %1459 = vmatpush1.bf16.msra.mxu0 %v985
    %1460 = vmatprep.subr.bf16.mxu0 %v1046
    %1461 = vmatpush2.bf16.msra.mxu0 %v1045
    %1462 = vmatprep.subr.bf16.mxu0 %v1042
    %1463 = vmatpush2.bf16.msra.mxu0 %v1041
    %1464 = vmatprep.subr.bf16.mxu0 %v1038
    %1465 = vmatpush2.bf16.msra.mxu0 %v1037
    %1466 = vmatprep.subr.bf16.mxu0 %v1034
    %1467 = vmatpush2.bf16.msra.mxu0 %v1033
    %1468 = vmatprep.subr.bf16.mxu0 %v1030
    %1469 = vmatpush2.bf16.msra.mxu0 %v1029
    %1470 = vmatprep.subr.bf16.mxu0 %v1026
    %1471 = vmatpush2.bf16.msra.mxu0 %v1025
    %1472 = vmatprep.subr.bf16.mxu0 %v1022
    %1473 = vmatpush2.bf16.msra.mxu0 %v1021
    %1474 = vmatprep.subr.bf16.mxu0 %v1018
    %1475 = vmatpush2.bf16.msra.mxu0 %v1017
    %1476 = vmatprep.mubr.bf16.mxu0 %v272
    %1477 = vmatmul.mubr.bf16.gmra.mxu0 %v271
    %v1478 = vpop.f32.mrf.mxu0
    %v1479 = vadd.f32 %v1438, %v1478
    %v1480 = vpop.f32.mrf.mxu0
    %v1481 = vadd.f32 %v1440, %v1480
    %v1482 = vpop.f32.mrf.mxu0
    %v1483 = vpop.f32.mrf.mxu0
    %1484 = vdwg.mxu0
    %vm1485 = vcmp.ge.f32.partialorder %v1356, 0.0
    %vm1486 = vcmp.ge.f32.partialorder %v1358, 0.0
    %vm1487 = vcmp.ge.f32.partialorder %v1479, 0.0
    %vm1488 = vcmp.ge.f32.partialorder %v1481, 0.0
    %v1489 = vmul.f32 %v1356, 0.25
    %v1490 = vmul.f32 %v1358, 0.25
    %v1491 = vmul.f32 %v1479, 0.25
    %v1492 = vmul.f32 %v1481, 0.25
    %v1493 = vsel %vm1485, %v1356, %v1489
    %v1494 = vsel %vm1486, %v1358, %v1490
    %v1495 = vsel %vm1487, %v1479, %v1491
    %v1496 = vsel %vm1488, %v1481, %v1492
    %s1497 = sld [smem:[#allocation2]]
    %v1498 = vstv %s1497
    %v1499 = vmul.f32 %v1498, %v1493
    %s1500 = sld [smem:[#allocation2 + $0x1]]
    %v1501 = vstv %s1500
    %v1502 = vmul.f32 %v1501, %v1493
    %1504 = vrot.lane.b32.xlu0 %v1502, 96
    %v1505 = vpop.permute.xlu0 %1504
    %v1507 = vadd.f32 %v1499, %v1505
    %s1508 = sld [smem:[#allocation2 + $0x2]]
    %v1509 = vstv %s1508
    %v1510 = vmul.f32 %v1509, %v1493
    %1512 = vrot.lane.b32.xlu0 %v1510, 64
    %v1513 = vpop.permute.xlu0 %1512
    %v1515 = vadd.f32 %v1507, %v1513
    %s1516 = sld [smem:[#allocation2 + $0x3]]
    %v1517 = vstv %s1516
    %v1518 = vmul.f32 %v1517, %v1493
    %1520 = vrot.lane.b32.xlu0 %v1518, 32
    %v1521 = vpop.permute.xlu0 %1520
    %v1523 = vadd.f32 %v1515, %v1521
    %s1524 = sld [smem:[#allocation2 + $0x4]]
    %v1525 = vstv %s1524
    %v1526 = vmul.f32 %v1525, %v1494
    %v1527 = vadd.f32 %v1523, %v1526
    %s1528 = sld [smem:[#allocation2 + $0x5]]
    %v1529 = vstv %s1528
    %v1530 = vmul.f32 %v1529, %v1494
    %1532 = vrot.lane.b32.xlu0 %v1530, 96
    %v1533 = vpop.permute.xlu0 %1532
    %v1535 = vadd.f32 %v1527, %v1533
    %s1536 = sld [smem:[#allocation2 + $0x6]]
    %v1537 = vstv %s1536
    %v1538 = vmul.f32 %v1537, %v1494
    %1540 = vrot.lane.b32.xlu0 %v1538, 64
    %v1541 = vpop.permute.xlu0 %1540
    %v1543 = vadd.f32 %v1535, %v1541
    %s1544 = sld [smem:[#allocation2 + $0x7]]
    %v1545 = vstv %s1544
    %v1546 = vmul.f32 %v1545, %v1494
    %1548 = vrot.lane.b32.xlu0 %v1546, 32
    %v1549 = vpop.permute.xlu0 %1548
    %v1551 = vadd.f32 %v1543, %v1549
    %s1552 = sld [smem:[#allocation2 + $0x8]]
    %v1553 = vstv %s1552
    %v1554 = vmul.f32 %v1553, %v1495
    %v1555 = vadd.f32 %v1551, %v1554
    %s1556 = sld [smem:[#allocation2 + $0x9]]
    %v1557 = vstv %s1556
    %v1558 = vmul.f32 %v1557, %v1495
    %1560 = vrot.lane.b32.xlu0 %v1558, 96
    %v1561 = vpop.permute.xlu0 %1560
    %v1563 = vadd.f32 %v1555, %v1561
    %s1564 = sld [smem:[#allocation2 + $0xa]]
    %v1565 = vstv %s1564
    %v1566 = vmul.f32 %v1565, %v1495
    %1568 = vrot.lane.b32.xlu0 %v1566, 64
    %v1569 = vpop.permute.xlu0 %1568
    %v1571 = vadd.f32 %v1563, %v1569
    %s1572 = sld [smem:[#allocation2 + $0xb]]
    %v1573 = vstv %s1572
    %v1574 = vmul.f32 %v1573, %v1495
    %1576 = vrot.lane.b32.xlu0 %v1574, 32
    %v1577 = vpop.permute.xlu0 %1576
    %v1579 = vadd.f32 %v1571, %v1577
    %s1580 = sld [smem:[#allocation2 + $0xc]]
    %v1581 = vstv %s1580
    %v1582 = vmul.f32 %v1581, %v1496
    %v1583 = vadd.f32 %v1579, %v1582
    %s1584 = sld [smem:[#allocation2 + $0xd]]
    %v1585 = vstv %s1584
    %v1586 = vmul.f32 %v1585, %v1496
    %1588 = vrot.lane.b32.xlu0 %v1586, 96
    %v1589 = vpop.permute.xlu0 %1588
    %v1591 = vadd.f32 %v1583, %v1589
    %s1592 = sld [smem:[#allocation2 + $0xe]]
    %v1593 = vstv %s1592
    %v1594 = vmul.f32 %v1593, %v1496
    %1596 = vrot.lane.b32.xlu0 %v1594, 64
    %v1597 = vpop.permute.xlu0 %1596
    %v1599 = vadd.f32 %v1591, %v1597
    %s1600 = sld [smem:[#allocation2 + $0xf]]
    %v1601 = vstv %s1600
    %v1602 = vmul.f32 %v1601, %v1496
    %1604 = vrot.lane.b32.xlu0 %v1602, 32
    %v1605 = vpop.permute.xlu0 %1604
    %v1607 = vadd.f32 %v1599, %v1605
    %v1608 = vmul.f32 %v1607, %v1607
    %vm1609 = vcmask 257024
    %v1610 = vsel %vm1609, %v1608, 0.0
    %1611 = vadd.xlane.f32.xlu0 %v1610
    %v1612 = vpop.xlane.xlu0 %1611
    %v1613 = vmax.f32 %v1612, 1e-24
    %v1614 = vrsqrt.pop %v1613
    %v1615 = vmul.f32 %v1607, %v1614
    %v1617 = vrot.slane %v1615, 2
    %v1619 = vsub.f32 %v1615, %v1617
    %v1620 = vmul.f32 %v1619, %v1619
    %vm1621 = vcmask 254976
    %v1622 = vsel %vm1621, %v1620, 0.0
    %1623 = vadd.xlane.f32.xlu0 %v1622
    %v1624 = vpop.xlane.xlu0 %1623
    %v1625 = vrcp.pop 32.0
    %v1626 = vmul.f32 %v1624, %v1625
    %vm1627 = vcmask 1041408
    %v1628 = vsel %vm1627, %v1626, 0.0
    %v1629 = vrot.slane %v1628, 4
    %v1630 = vadd.f32 %v1628, %v1629
    %v1631 = vrot.slane %v1630, 2
    %v1632 = vadd.f32 %v1630, %v1631
    %v1633 = vrot.slane %v1632, 1
    %v1634 = vadd.f32 %v1632, %v1633
    %v1635 = vrcp.pop 2.0
    %v1636 = vmul.f32 %v1634, %v1635
    %1637 = vst [vmem:[#allocation9] sm:$0x3] %v1626
    %1638 = vst [vmem:[#allocation9 + $0x2] sm:$0x1] %v1636
    %1639 = vst [vmem:[#allocation9 + $0x3] sm:$0x1f] 0.0
    // Predicated region
    $region26: #{tpu_custom_call.1} parent=1 // pred_check
      _
    $region27: #{tpu_custom_call.1} parent=1 // pred_check_branch
      %1641 = sbr.rel (0) target = $region29
    $region28: #{tpu_custom_call.1} parent=1 // pred_region
      %s1643 = ssub.s32 128, 128
      %1644 = vsyncadd [#allocation4], %s1643
      %s1646 = sshll.u32 [#allocation9], 4
      %s1647 = int_to_ptr.vmem [resolvable:$true] %s1646
      %1649 = dma.vmem_to_hbm [thread:$0]  %s1647, 128, %s3, [#allocation4]
    $region29: #{tpu_custom_call.1} parent=1 // pred_fallthru
      _
    // Predicated region
    $region30: #{tpu_custom_call.1} parent=1 // pred_check
      _
    $region31: #{tpu_custom_call.1} parent=1 // pred_check_branch
      %1651 = sbr.rel (0) target = $region33
    $region32: #{tpu_custom_call.1} parent=1 // pred_region
      %1652 = dma.done [#allocation4], 128
    $region33: #{tpu_custom_call.1} parent=1 // pred_fallthru
      _
    %1653 = vsyncpa [#allocation3], 1
    %1654 = vsyncpa [#allocation8], 1
    %1655 = vsyncpa [#allocation4], 1
    %1656 = vsyncpa [#allocation5], 1

</llo_original>
